<compile_context>
chip_gen: v7x
topology: tpu7x:2x2x1
jax: 0.10.0
libtpu: 0.0.40
codegen_flags: <defaults>
</compile_context>

<pallas_src>
import functools

import jax
import jax.numpy as jnp
from jax import lax
from jax.experimental import pallas as pl
from jax.experimental.pallas import tpu as pltpu

BN_EPS = 1e-5
H1, H2, H3, HOUT = 64, 32, 16, 1
BIAS_PAD = 128  # 64 + 32 + 16 + 1 = 113, padded to 128 sublanes


def titanic_mlp_kernel(x_ref, w1_ref, w2_ref, w3_ref, w4_ref, bias_ref, o_ref):
    # x_ref: (F, Bt) bf16 -- batch on the lane axis (lane-dense loads/stores).
    # wN_ref: bf16 weights with BN already folded in; bias_ref: packed f32 biases.
    x = x_ref[...]

    b1 = bias_ref[0:H1, :]                                   # (64, 1) f32
    b2 = bias_ref[H1:H1 + H2, :]                             # (32, 1)
    b3 = bias_ref[H1 + H2:H1 + H2 + H3, :]                   # (16, 1)
    b4 = bias_ref[H1 + H2 + H3:H1 + H2 + H3 + HOUT, :]       # (1, 1)

    # hidden1 (+ folded bn1) + ReLU   (dropout = identity in eval mode)
    h = jnp.dot(w1_ref[...], x, preferred_element_type=jnp.float32) + b1
    h = jnp.maximum(h, 0.0)                                  # (64, Bt) f32

    # hidden2 (+ folded bn2) + ReLU
    h = jnp.dot(w2_ref[...], h.astype(w2_ref.dtype),
                preferred_element_type=jnp.float32) + b2
    h = jnp.maximum(h, 0.0)                                  # (32, Bt)

    # hidden3 + ReLU
    h = jnp.dot(w3_ref[...], h.astype(w3_ref.dtype),
                preferred_element_type=jnp.float32) + b3
    h = jnp.maximum(h, 0.0)                                  # (16, Bt)

    # output + sigmoid (lane-dense (1, Bt) store)
    h = jnp.dot(w4_ref[...], h.astype(w4_ref.dtype),
                preferred_element_type=jnp.float32) + b4
    o_ref[...] = jax.nn.sigmoid(h)                           # (1, Bt) f32


def fold_params(p, compute_dtype=jnp.bfloat16):
    """Fold BatchNorm into the Linear weights/biases; cast weights for the MXU."""
    scale1 = p["g1"] * lax.rsqrt(p["v1"] + BN_EPS)           # (64,)
    w1 = (p["w1"] * scale1[:, None]).astype(compute_dtype)   # (64, F)
    b1 = (p["b1"] - p["m1"]) * scale1 + p["be1"]             # (64,)

    scale2 = p["g2"] * lax.rsqrt(p["v2"] + BN_EPS)           # (32,)
    w2 = (p["w2"] * scale2[:, None]).astype(compute_dtype)   # (32, 64)
    b2 = (p["b2"] - p["m2"]) * scale2 + p["be2"]             # (32,)

    w3 = p["w3"].astype(compute_dtype)                       # (16, 32)
    w4 = p["w4"].astype(compute_dtype)                       # (1, 16)

    bias = jnp.concatenate(
        [b1, b2, p["b3"], p["b4"],
         jnp.zeros((BIAS_PAD - (H1 + H2 + H3 + HOUT),), jnp.float32)]
    ).astype(jnp.float32).reshape(BIAS_PAD, 1)               # (128, 1) f32
    return w1, w2, w3, w4, bias


@functools.partial(jax.jit, static_argnames=("block_b",))
def titanic_forward(x, params, block_b=1024):
    """x: (B, input_size) float32 -> (B, 1) float32."""
    B, F = x.shape
    w1, w2, w3, w4, bias = fold_params(params)

    # Pad batch to a lane-aligned multiple of the tile size, batch on the lane axis.
    Bp = max(128, ((B + 127) // 128) * 128)
    bt = min(block_b, Bp)
    Bp = ((Bp + bt - 1) // bt) * bt
    xp = jnp.zeros((Bp, F), x.dtype).at[:B].set(x)
    xT = xp.T.astype(jnp.bfloat16)                           # (F, Bp)

    const = lambda i: (0, 0)                                 # weights resident in VMEM
    out = pl.pallas_call(
        titanic_mlp_kernel,
        out_shape=jax.ShapeDtypeStruct((1, Bp), jnp.float32),
        grid=(Bp // bt,),
        in_specs=[
            pl.BlockSpec((F, bt), lambda i: (0, i)),         # streamed batch tiles
            pl.BlockSpec((H1, F), const),
            pl.BlockSpec((H2, H1), const),
            pl.BlockSpec((H3, H2), const),
            pl.BlockSpec((HOUT, H3), const),
            pl.BlockSpec((BIAS_PAD, 1), const),
        ],
        out_specs=pl.BlockSpec((1, bt), lambda i: (0, i)),
        compiler_params=pltpu.CompilerParams(
            dimension_semantics=("parallel",)),              # megacore split on v7x
    )(xT, w1, w2, w3, w4, bias)
    return out[:, :B].T                                      # (B, 1)


def init_params(key, input_size):
    """Deterministic synthetic parameters, PyTorch-native shapes: W=(out,in), b=(out,)."""
    ks = jax.random.split(key, 12)

    def lin(kw, kb, fan_in, fan_out):
        bound = 1.0 / jnp.sqrt(float(fan_in))
        w = jax.random.uniform(kw, (fan_out, fan_in), jnp.float32, -bound, bound)
        b = jax.random.uniform(kb, (fan_out,), jnp.float32, -bound, bound)
        return w, b

    w1, b1 = lin(ks[0], ks[1], input_size, H1)
    w2, b2 = lin(ks[2], ks[3], H1, H2)
    w3, b3 = lin(ks[4], ks[5], H2, H3)
    w4, b4 = lin(ks[6], ks[7], H3, HOUT)

    g1 = jnp.ones((H1,), jnp.float32); be1 = jnp.zeros((H1,), jnp.float32)
    m1 = 0.1 * jax.random.normal(ks[8], (H1,), jnp.float32)
    v1 = 1.0 + 0.1 * jax.random.uniform(ks[9], (H1,), jnp.float32)

    g2 = jnp.ones((H2,), jnp.float32); be2 = jnp.zeros((H2,), jnp.float32)
    m2 = 0.1 * jax.random.normal(ks[10], (H2,), jnp.float32)
    v2 = 1.0 + 0.1 * jax.random.uniform(ks[11], (H2,), jnp.float32)

    return dict(w1=w1, b1=b1, g1=g1, be1=be1, m1=m1, v1=v1,
                w2=w2, b2=b2, g2=g2, be2=be2, m2=m2, v2=v2,
                w3=w3, b3=b3, w4=w4, b4=b4)


def reference_forward(x, p):
    """Plain-JAX f32 reference of the PyTorch forward (eval mode)."""
    h = x @ p["w1"].T + p["b1"]
    h = (h - p["m1"]) * lax.rsqrt(p["v1"] + BN_EPS) * p["g1"] + p["be1"]
    h = jnp.maximum(h, 0.0)
    h = h @ p["w2"].T + p["b2"]
    h = (h - p["m2"]) * lax.rsqrt(p["v2"] + BN_EPS) * p["g2"] + p["be2"]
    h = jnp.maximum(h, 0.0)
    h = jnp.maximum(h @ p["w3"].T + p["b3"], 0.0)
    return jax.nn.sigmoid(h @ p["w4"].T + p["b4"])


if __name__ == "__main__":
    key = jax.random.PRNGKey(0)
    k_param, k_x = jax.random.split(key)

    batch = 300          # exercises padding (-> 384) and a multi-step batch grid
    input_size = 8       # Titanic tabular feature count
    params = init_params(k_param, input_size)
    x = jax.random.normal(k_x, (batch, input_size), jnp.float32)

    out = jax.block_until_ready(titanic_forward(x, params, block_b=128))
    ref = reference_forward(x, params)

    assert out.shape == (batch, 1)
    # bf16 dot operands -> loosened tolerance vs the f32 reference (BN fold is exact).
    assert jnp.allclose(out, ref, atol=2e-2, rtol=2e-2), "mismatch vs JAX reference"

    # TODO(synk): dropout is identity (inference semantics); training-mode stochastic
    # dropout would use pltpu.prng_seed / pltpu.stateful_bernoulli.
    print("KERNEL_OK")
</pallas_src>

<mosaic_0001>
module attributes {stable_mosaic.version = 11 : i64} {
  func.func @titanic_mlp_kernel(%arg0: i32, %arg1: memref<8x128xbf16, #tpu.memory_space<vmem>>, %arg2: memref<64x8xbf16, #tpu.memory_space<vmem>>, %arg3: memref<32x64xbf16, #tpu.memory_space<vmem>>, %arg4: memref<16x32xbf16, #tpu.memory_space<vmem>>, %arg5: memref<1x16xbf16, #tpu.memory_space<vmem>>, %arg6: memref<128x1xf32, #tpu.memory_space<vmem>>, %arg7: memref<1x128xf32, #tpu.memory_space<vmem>>) attributes {dimension_semantics = [#tpu.dimension_semantics<parallel>], iteration_bounds = array<i64: 3>, scalar_prefetch = 0 : i64, scratch_operands = 0 : i64, tpu.core_type = #tpu.core_type<tc>, window_params = [{transform_indices = @transform_0, window_bounds = array<i64: 8, 128>}, {pipeline_mode = #tpu.pipeline_mode<synchronous>, transform_indices = @transform_1, window_bounds = array<i64: 64, 8>}, {pipeline_mode = #tpu.pipeline_mode<synchronous>, transform_indices = @transform_2, window_bounds = array<i64: 32, 64>}, {pipeline_mode = #tpu.pipeline_mode<synchronous>, transform_indices = @transform_3, window_bounds = array<i64: 16, 32>}, {pipeline_mode = #tpu.pipeline_mode<synchronous>, transform_indices = @transform_4, window_bounds = array<i64: 1, 16>}, {pipeline_mode = #tpu.pipeline_mode<synchronous>, transform_indices = @transform_5, window_bounds = array<i64: 128, 1>}, {transform_indices = @transform_6, window_bounds = array<i64: 1, 128>}]} {
    %c0 = arith.constant 0 : index
    %c0_0 = arith.constant 0 : index
    %0 = vector.load %arg1[%c0, %c0_0] : memref<8x128xbf16, #tpu.memory_space<vmem>>, vector<8x128xbf16>
    %c0_1 = arith.constant 0 : index
    %c0_2 = arith.constant 0 : index
    %1 = vector.load %arg6[%c0_1, %c0_2] : memref<128x1xf32, #tpu.memory_space<vmem>>, vector<64x1xf32>
    %c64 = arith.constant 64 : index
    %c0_3 = arith.constant 0 : index
    %2 = vector.load %arg6[%c64, %c0_3] : memref<128x1xf32, #tpu.memory_space<vmem>>, vector<32x1xf32>
    %c96 = arith.constant 96 : index
    %c0_4 = arith.constant 0 : index
    %3 = vector.load %arg6[%c96, %c0_4] : memref<128x1xf32, #tpu.memory_space<vmem>>, vector<16x1xf32>
    %c112 = arith.constant 112 : index
    %c0_5 = arith.constant 0 : index
    %4 = vector.load %arg6[%c112, %c0_5] : memref<128x1xf32, #tpu.memory_space<vmem>>, vector<1x1xf32>
    %c0_6 = arith.constant 0 : index
    %c0_7 = arith.constant 0 : index
    %5 = vector.load %arg2[%c0_6, %c0_7] : memref<64x8xbf16, #tpu.memory_space<vmem>>, vector<64x8xbf16>
    %cst = arith.constant dense<0.000000e+00> : vector<64x128xf32>
    %6 = tpu.matmul %5, %0, %cst {dimension_numbers = #tpu.dot_dimension_numbers<[1], [0], [0], [1], [0, 0, 1, 1], [], []>} : vector<64x8xbf16>, vector<8x128xbf16>, vector<64x128xf32> -> vector<64x128xf32>
    %7 = vector.broadcast %1 : vector<64x1xf32> to vector<64x128xf32>
    %8 = arith.addf %6, %7 : vector<64x128xf32>
    %cst_8 = arith.constant 0.000000e+00 : f32
    %9 = vector.broadcast %cst_8 : f32 to vector<64x128xf32>
    %10 = arith.maximumf %8, %9 : vector<64x128xf32>
    %c0_9 = arith.constant 0 : index
    %c0_10 = arith.constant 0 : index
    %11 = vector.load %arg3[%c0_9, %c0_10] : memref<32x64xbf16, #tpu.memory_space<vmem>>, vector<32x64xbf16>
    %12 = arith.truncf %10 : vector<64x128xf32> to vector<64x128xbf16>
    %cst_11 = arith.constant dense<0.000000e+00> : vector<32x128xf32>
    %13 = tpu.matmul %11, %12, %cst_11 {dimension_numbers = #tpu.dot_dimension_numbers<[1], [0], [0], [1], [0, 0, 1, 1], [], []>} : vector<32x64xbf16>, vector<64x128xbf16>, vector<32x128xf32> -> vector<32x128xf32>
    %14 = vector.broadcast %2 : vector<32x1xf32> to vector<32x128xf32>
    %15 = arith.addf %13, %14 : vector<32x128xf32>
    %cst_12 = arith.constant 0.000000e+00 : f32
    %16 = vector.broadcast %cst_12 : f32 to vector<32x128xf32>
    %17 = arith.maximumf %15, %16 : vector<32x128xf32>
    %c0_13 = arith.constant 0 : index
    %c0_14 = arith.constant 0 : index
    %18 = vector.load %arg4[%c0_13, %c0_14] : memref<16x32xbf16, #tpu.memory_space<vmem>>, vector<16x32xbf16>
    %19 = arith.truncf %17 : vector<32x128xf32> to vector<32x128xbf16>
    %cst_15 = arith.constant dense<0.000000e+00> : vector<16x128xf32>
    %20 = tpu.matmul %18, %19, %cst_15 {dimension_numbers = #tpu.dot_dimension_numbers<[1], [0], [0], [1], [0, 0, 1, 1], [], []>} : vector<16x32xbf16>, vector<32x128xbf16>, vector<16x128xf32> -> vector<16x128xf32>
    %21 = vector.broadcast %3 : vector<16x1xf32> to vector<16x128xf32>
    %22 = arith.addf %20, %21 : vector<16x128xf32>
    %cst_16 = arith.constant 0.000000e+00 : f32
    %23 = vector.broadcast %cst_16 : f32 to vector<16x128xf32>
    %24 = arith.maximumf %22, %23 : vector<16x128xf32>
    %c0_17 = arith.constant 0 : index
    %c0_18 = arith.constant 0 : index
    %25 = vector.load %arg5[%c0_17, %c0_18] : memref<1x16xbf16, #tpu.memory_space<vmem>>, vector<1x16xbf16>
    %26 = arith.truncf %24 : vector<16x128xf32> to vector<16x128xbf16>
    %cst_19 = arith.constant dense<0.000000e+00> : vector<1x128xf32>
    %27 = tpu.matmul %25, %26, %cst_19 {dimension_numbers = #tpu.dot_dimension_numbers<[1], [0], [0], [1], [0, 0, 1, 1], [], []>} : vector<1x16xbf16>, vector<16x128xbf16>, vector<1x128xf32> -> vector<1x128xf32>
    %28 = vector.broadcast %4 : vector<1x1xf32> to vector<1x128xf32>
    %29 = arith.addf %27, %28 : vector<1x128xf32>
    %30 = arith.negf %29 : vector<1x128xf32>
    %31 = math.exp %30 : vector<1x128xf32>
    %cst_20 = arith.constant 1.000000e+00 : f32
    %32 = vector.broadcast %cst_20 : f32 to vector<1x128xf32>
    %33 = arith.addf %32, %31 : vector<1x128xf32>
    %34 = arith.divf %32, %33 : vector<1x128xf32>
    %c0_21 = arith.constant 0 : index
    %c0_22 = arith.constant 0 : index
    %35 = vector.load %arg7[%c0_21, %c0_22] : memref<1x128xf32, #tpu.memory_space<vmem>>, vector<1x128xf32>
    tpu.vector_store %arg7[%c0_21, %c0_22], %34 {strides = array<i32>} : memref<1x128xf32, #tpu.memory_space<vmem>>, vector<1x128xf32>,
    return
  }
  func.func @transform_0(%arg0: i32) -> (i32, i32) {
    %c0_i32 = arith.constant 0 : i32
    %c0_i32_0 = arith.constant 0 : i32
    return %c0_i32, %arg0 : i32, i32
  }
  func.func @transform_1(%arg0: i32) -> (i32, i32) {
    %c0_i32 = arith.constant 0 : i32
    %c0_i32_0 = arith.constant 0 : i32
    %c0_i32_1 = arith.constant 0 : i32
    return %c0_i32, %c0_i32_0 : i32, i32
  }
  func.func @transform_2(%arg0: i32) -> (i32, i32) {
    %c0_i32 = arith.constant 0 : i32
    %c0_i32_0 = arith.constant 0 : i32
    %c0_i32_1 = arith.constant 0 : i32
    return %c0_i32, %c0_i32_0 : i32, i32
  }
  func.func @transform_3(%arg0: i32) -> (i32, i32) {
    %c0_i32 = arith.constant 0 : i32
    %c0_i32_0 = arith.constant 0 : i32
    %c0_i32_1 = arith.constant 0 : i32
    return %c0_i32, %c0_i32_0 : i32, i32
  }
  func.func @transform_4(%arg0: i32) -> (i32, i32) {
    %c0_i32 = arith.constant 0 : i32
    %c0_i32_0 = arith.constant 0 : i32
    %c0_i32_1 = arith.constant 0 : i32
    return %c0_i32, %c0_i32_0 : i32, i32
  }
  func.func @transform_5(%arg0: i32) -> (i32, i32) {
    %c0_i32 = arith.constant 0 : i32
    %c0_i32_0 = arith.constant 0 : i32
    %c0_i32_1 = arith.constant 0 : i32
    return %c0_i32, %c0_i32_0 : i32, i32
  }
  func.func @transform_6(%arg0: i32) -> (i32, i32) {
    %c0_i32 = arith.constant 0 : i32
    %c0_i32_0 = arith.constant 0 : i32
    return %c0_i32, %arg0 : i32, i32
  }
}

</mosaic_0001>

<llo_original>
// kernel: titanic_forward.1
$region0: #{titanic_forward.1}
  #allocation0 [shape = 'u32[]', space=smem, size = 0x4, offset = 0x4, fixed_abs, tag = 'smem constant byte address 0x4 - core index']
  #allocation1 [shape = 'u32[144,128]{1,0:T(1,128)}', space=vmem, size = 0x12000, scoped, tag = 'internal scratch']
  %s0 = inlined_call_operand.vmem [shape: bf16[8,384], index: 0, kind: input, shape index: {}]
  %s1 = inlined_call_operand.vmem [shape: bf16[64,8], index: 1, kind: input, shape index: {}]
  %s2 = inlined_call_operand.vmem [shape: bf16[32,64], index: 2, kind: input, shape index: {}]
  %s3 = inlined_call_operand.vmem [shape: bf16[16,32], index: 3, kind: input, shape index: {}]
  %s4 = inlined_call_operand.vmem [shape: bf16[1,16], index: 4, kind: input, shape index: {}]
  %s5 = inlined_call_operand.vmem [shape: f32[128,1], index: 5, kind: input, shape index: {}]
  %s6 = inlined_call_operand.vmem [shape: f32[1,384], index: 6, kind: output, shape index: {}]
  %s7 = sld [smem:[#allocation0]]
  $region57: #{titanic_forward.1} parent=0
    _
  %s9 = ssub.s32 1, %s7
  %s10 = scalar_select 0, %s9, %s7
  loop: start=0, step=1, limit=5
  $region2: #{titanic_forward.1} parent=0 // loop_pre_header
    _
  $region3: #{titanic_forward.1} parent=0 // loop_header
    %s12 = sphi 0, %s16
    %p13 = scmp.ge.s32.totalorder %s12, 5
    %s22 = sphi 0, %s24
    %s25 = sphi 0, %s22
    %s26 = sphi 0, %s25
    %s42 = sphi 0, %s26
    %s46 = sphi 0, %s46
    %s48 = sphi 0, %s46
    %s49 = sphi 0, %s48
    %s63 = sphi 0, %s49
    %s67 = sphi 0, %s67
    %s69 = sphi 0, %s67
    %s70 = sphi 0, %s69
    %s84 = sphi 0, %s70
    %s88 = sphi 0, %s88
    %s90 = sphi 0, %s88
    %s91 = sphi 0, %s90
    %s105 = sphi 0, %s91
    %s109 = sphi 0, %s109
    %s111 = sphi 0, %s109
    %s112 = sphi 0, %s111
    %s126 = sphi 0, %s112
    %s130 = sphi 0, %s130
    %s132 = sphi 0, %s130
    %s133 = sphi 0, %s132
    %s147 = sphi 0, %s133
    %s153 = sphi 0, %s155
    %s156 = sphi 0, %s153
    %s157 = sphi 0, %s156
    %s173 = sphi 0, %s157
  $region4: #{titanic_forward.1} parent=0 // loop_header_branch
    %15 = sbr.rel (%p13) target = $region8
  $region5: #{titanic_forward.1} parent=0 // loop_body
    %s17 = ssub.s32 %s12, 1
    %s18 = ssub.s32 %s12, 2
    %s19 = sadd.s32 %s12, 1
    %s20 = ssub.s32 %s12, %s19
    %p21 = scmp.eq.s32.totalorder %s20, 0
    %s23 = sadd.s32 %s22, 1
    %s24 = scalar_select %p21, %s22, %s23
    %p27 = pneg %p21
    %p28 = scmp.eq.s32.totalorder %s12, 2
    %p29 = por %p27, %p28
    %p30 = scmp.ne.s32.totalorder %s22, %s25
    %p31 = scmp.eq.s32.totalorder %s12, 0
    %p32 = por %p30, %p31
    %p33 = scmp.ne.s32.totalorder %s22, %s25
    %p34 = scmp.eq.s32.totalorder %s17, 2
    %p35 = por %p33, %p34
    %p36 = scmp.ne.s32.totalorder %s25, %s26
    %p37 = scmp.eq.s32.totalorder %s17, 0
    %p38 = por %p36, %p37
    %p39 = scmp.ne.s32.totalorder %s25, %s26
    %p40 = scmp.eq.s32.totalorder %s18, 2
    %p41 = por %p39, %p40
    %p43 = scmp.ne.s32.totalorder %s26, %s42
    %p44 = scmp.eq.s32.totalorder %s18, 0
    %p45 = por %p43, %p44
    %s47 = sadd.s32 %s46, 1
    %p50 = scmp.eq.s32.totalorder %s12, 2
    %p51 = scmp.ne.s32.totalorder %s46, %s48
    %p52 = scmp.eq.s32.totalorder %s12, 0
    %p53 = por %p51, %p52
    %p54 = scmp.ne.s32.totalorder %s46, %s48
    %p55 = scmp.eq.s32.totalorder %s17, 2
    %p56 = por %p54, %p55
    %p57 = scmp.ne.s32.totalorder %s48, %s49
    %p58 = scmp.eq.s32.totalorder %s17, 0
    %p59 = por %p57, %p58
    %p60 = scmp.ne.s32.totalorder %s48, %s49
    %p61 = scmp.eq.s32.totalorder %s18, 2
    %p62 = por %p60, %p61
    %p64 = scmp.ne.s32.totalorder %s49, %s63
    %p65 = scmp.eq.s32.totalorder %s18, 0
    %p66 = por %p64, %p65
    %s68 = sadd.s32 %s67, 1
    %p71 = scmp.eq.s32.totalorder %s12, 2
    %p72 = scmp.ne.s32.totalorder %s67, %s69
    %p73 = scmp.eq.s32.totalorder %s12, 0
    %p74 = por %p72, %p73
    %p75 = scmp.ne.s32.totalorder %s67, %s69
    %p76 = scmp.eq.s32.totalorder %s17, 2
    %p77 = por %p75, %p76
    %p78 = scmp.ne.s32.totalorder %s69, %s70
    %p79 = scmp.eq.s32.totalorder %s17, 0
    %p80 = por %p78, %p79
    %p81 = scmp.ne.s32.totalorder %s69, %s70
    %p82 = scmp.eq.s32.totalorder %s18, 2
    %p83 = por %p81, %p82
    %p85 = scmp.ne.s32.totalorder %s70, %s84
    %p86 = scmp.eq.s32.totalorder %s18, 0
    %p87 = por %p85, %p86
    %s89 = sadd.s32 %s88, 1
    %p92 = scmp.eq.s32.totalorder %s12, 2
    %p93 = scmp.ne.s32.totalorder %s88, %s90
    %p94 = scmp.eq.s32.totalorder %s12, 0
    %p95 = por %p93, %p94
    %p96 = scmp.ne.s32.totalorder %s88, %s90
    %p97 = scmp.eq.s32.totalorder %s17, 2
    %p98 = por %p96, %p97
    %p99 = scmp.ne.s32.totalorder %s90, %s91
    %p100 = scmp.eq.s32.totalorder %s17, 0
    %p101 = por %p99, %p100
    %p102 = scmp.ne.s32.totalorder %s90, %s91
    %p103 = scmp.eq.s32.totalorder %s18, 2
    %p104 = por %p102, %p103
    %p106 = scmp.ne.s32.totalorder %s91, %s105
    %p107 = scmp.eq.s32.totalorder %s18, 0
    %p108 = por %p106, %p107
    %s110 = sadd.s32 %s109, 1
    %p113 = scmp.eq.s32.totalorder %s12, 2
    %p114 = scmp.ne.s32.totalorder %s109, %s111
    %p115 = scmp.eq.s32.totalorder %s12, 0
    %p116 = por %p114, %p115
    %p117 = scmp.ne.s32.totalorder %s109, %s111
    %p118 = scmp.eq.s32.totalorder %s17, 2
    %p119 = por %p117, %p118
    %p120 = scmp.ne.s32.totalorder %s111, %s112
    %p121 = scmp.eq.s32.totalorder %s17, 0
    %p122 = por %p120, %p121
    %p123 = scmp.ne.s32.totalorder %s111, %s112
    %p124 = scmp.eq.s32.totalorder %s18, 2
    %p125 = por %p123, %p124
    %p127 = scmp.ne.s32.totalorder %s112, %s126
    %p128 = scmp.eq.s32.totalorder %s18, 0
    %p129 = por %p127, %p128
    %s131 = sadd.s32 %s130, 1
    %p134 = scmp.eq.s32.totalorder %s12, 2
    %p135 = scmp.ne.s32.totalorder %s130, %s132
    %p136 = scmp.eq.s32.totalorder %s12, 0
    %p137 = por %p135, %p136
    %p138 = scmp.ne.s32.totalorder %s130, %s132
    %p139 = scmp.eq.s32.totalorder %s17, 2
    %p140 = por %p138, %p139
    %p141 = scmp.ne.s32.totalorder %s132, %s133
    %p142 = scmp.eq.s32.totalorder %s17, 0
    %p143 = por %p141, %p142
    %p144 = scmp.ne.s32.totalorder %s132, %s133
    %p145 = scmp.eq.s32.totalorder %s18, 2
    %p146 = por %p144, %p145
    %p148 = scmp.ne.s32.totalorder %s133, %s147
    %p149 = scmp.eq.s32.totalorder %s18, 0
    %p150 = por %p148, %p149
    %s151 = ssub.s32 %s12, %s19
    %p152 = scmp.eq.s32.totalorder %s151, 0
    %s154 = sadd.s32 %s153, 1
    %s155 = scalar_select %p152, %s153, %s154
    %p158 = pneg %p152
    %p159 = scmp.eq.s32.totalorder %s12, 2
    %p160 = por %p158, %p159
    %p161 = scmp.ne.s32.totalorder %s153, %s156
    %p162 = scmp.eq.s32.totalorder %s12, 0
    %p163 = por %p161, %p162
    %p164 = scmp.ne.s32.totalorder %s153, %s156
    %p165 = scmp.eq.s32.totalorder %s17, 2
    %p166 = por %p164, %p165
    %p167 = scmp.ne.s32.totalorder %s156, %s157
    %p168 = scmp.eq.s32.totalorder %s17, 0
    %p169 = por %p167, %p168
    %p170 = scmp.ne.s32.totalorder %s156, %s157
    %p171 = scmp.eq.s32.totalorder %s18, 2
    %p172 = por %p170, %p171
    %p174 = scmp.ne.s32.totalorder %s157, %s173
    %p175 = scmp.eq.s32.totalorder %s18, 0
    %p176 = por %p174, %p175
    %p177 = scmp.le.s32.totalorder 1, %s12
    %p178 = scmp.lt.s32.totalorder %s12, 4
    %p179 = pnand %p177, %p178
    %p180 = pneg %p179
    // Predicated region
    $region9: #{titanic_forward.1} parent=5 // pred_check
      _
    $region10: #{titanic_forward.1} parent=5 // pred_check_branch
      %182 = sbr.rel (%p179) target = $region12
    $region11: #{titanic_forward.1} parent=5 // pred_region
      %s183 = ssub.s32 %s12, 1
      // Predicated region
      $region13: #{titanic_forward.1} parent=11 // pred_check
        %p184 = pneg %p59
      $region14: #{titanic_forward.1} parent=11 // pred_check_branch
        %186 = sbr.rel (%p184) target = $region16
      $region15: #{titanic_forward.1} parent=11 // pred_region
        _
      $region16: #{titanic_forward.1} parent=11 // pred_fallthru
        _
      // Predicated region
      $region17: #{titanic_forward.1} parent=11 // pred_check
        %p187 = pneg %p80
      $region18: #{titanic_forward.1} parent=11 // pred_check_branch
        %189 = sbr.rel (%p187) target = $region20
      $region19: #{titanic_forward.1} parent=11 // pred_region
        _
      $region20: #{titanic_forward.1} parent=11 // pred_fallthru
        _
      // Predicated region
      $region21: #{titanic_forward.1} parent=11 // pred_check
        %p190 = pneg %p101
      $region22: #{titanic_forward.1} parent=11 // pred_check_branch
        %192 = sbr.rel (%p190) target = $region24
      $region23: #{titanic_forward.1} parent=11 // pred_region
        _
      $region24: #{titanic_forward.1} parent=11 // pred_fallthru
        _
      // Predicated region
      $region25: #{titanic_forward.1} parent=11 // pred_check
        %p193 = pneg %p122
      $region26: #{titanic_forward.1} parent=11 // pred_check_branch
        %195 = sbr.rel (%p193) target = $region28
      $region27: #{titanic_forward.1} parent=11 // pred_region
        _
      $region28: #{titanic_forward.1} parent=11 // pred_fallthru
        _
      // Predicated region
      $region29: #{titanic_forward.1} parent=11 // pred_check
        %p196 = pneg %p143
      $region30: #{titanic_forward.1} parent=11 // pred_check_branch
        %198 = sbr.rel (%p196) target = $region32
      $region31: #{titanic_forward.1} parent=11 // pred_region
        _
      $region32: #{titanic_forward.1} parent=11 // pred_fallthru
        _
    $region12: #{titanic_forward.1} parent=5 // pred_fallthru
      _
    %p199 = scmp.lt.s32.totalorder %s12, 3
    // Predicated region
    $region33: #{titanic_forward.1} parent=5 // pred_check
      %p200 = pneg %p199
    $region34: #{titanic_forward.1} parent=5 // pred_check_branch
      %202 = sbr.rel (%p200) target = $region36
    $region35: #{titanic_forward.1} parent=5 // pred_region
      // Predicated region
      $region37: #{titanic_forward.1} parent=35 // pred_check
        %p203 = pneg %p32
      $region38: #{titanic_forward.1} parent=35 // pred_check_branch
        %205 = sbr.rel (%p203) target = $region40
      $region39: #{titanic_forward.1} parent=35 // pred_region
        %p206 = scmp.lt.s32.totalorder %s12, 2
        %s207 = scalar_select %p206, %s12, 2
        %s208 = smul.addr %s207, 4
        %s209 = scalar_lea.vmem %s0, %s208
      $region40: #{titanic_forward.1} parent=35 // pred_fallthru
        _
    $region36: #{titanic_forward.1} parent=5 // pred_fallthru
      _
    %p210 = scmp.le.s32.totalorder 1, %s12
    %p211 = scmp.lt.s32.totalorder %s12, 4
    %p212 = pnand %p210, %p211
    %p213 = pneg %p212
    // Predicated region
    $region41: #{titanic_forward.1} parent=5 // pred_check
      _
    $region42: #{titanic_forward.1} parent=5 // pred_check_branch
      %215 = sbr.rel (%p212) target = $region44
    $region43: #{titanic_forward.1} parent=5 // pred_region
      %s216 = ssub.s32 %s12, 1
      %p217 = scmp.lt.s32.totalorder %s17, 2
      %s218 = scalar_select %p217, %s17, 2
      %s219 = smul.addr %s218, 4
      %s220 = scalar_lea.vmem %s0, %s219
      %p221 = pneg %p38
      %p222 = pneg %p35
      %p223 = pneg %p59
      %p224 = pneg %p56
      %p225 = pneg %p80
      %p226 = pneg %p77
      %p227 = pneg %p101
      %p228 = pneg %p98
      %p229 = pneg %p122
      %p230 = pneg %p119
      %p231 = pneg %p143
      %p232 = pneg %p140
      %p233 = pneg %p169
      %p234 = pneg %p166
      %p235 = scmp.lt.s32.totalorder %s17, 2
      %s236 = scalar_select %p235, %s17, 2
      %s237 = scalar_lea.vmem %s6, %s236
      %p238 = scmp.lt.s32.totalorder %s17, 2
      %s239 = scalar_select %p238, %s17, 2
      %s240 = smul.addr %s239, 4
      %s241 = scalar_lea.vmem %s0, %s240
      %p242 = scmp.lt.s32.totalorder %s17, 2
      %s243 = scalar_select %p242, %s17, 2
      %s244 = scalar_lea.vmem %s6, %s243
      %v246 = vld [vmem:[%s241] sm:$0xf]
      %v247 = vld [vmem:[%s5] sm:$0xff]
      %v248 = vld [vmem:[%s5 + $0x8] sm:$0xff]
      %v249 = vld [vmem:[%s5 + $0x10] sm:$0xff]
      %v250 = vld [vmem:[%s5 + $0x18] sm:$0xff]
      %v251 = vld [vmem:[%s5 + $0x20] sm:$0xff]
      %v252 = vld [vmem:[%s5 + $0x28] sm:$0xff]
      %v253 = vld [vmem:[%s5 + $0x30] sm:$0xff]
      %v254 = vld [vmem:[%s5 + $0x38] sm:$0xff]
      %v255 = vld [vmem:[%s5 + $0x40] sm:$0xff]
      %v256 = vld [vmem:[%s5 + $0x48] sm:$0xff]
      %v257 = vld [vmem:[%s5 + $0x50] sm:$0xff]
      %v258 = vld [vmem:[%s5 + $0x58] sm:$0xff]
      %v259 = vld [vmem:[%s5 + $0x60] sm:$0xff]
      %v260 = vld [vmem:[%s5 + $0x68] sm:$0xff]
      %v261 = vld [vmem:[%s5 + $0x70] sm:$0x1]
      %v262 = vld [vmem:[%s1] sm:$0xf]
      %v263 = vld [vmem:[%s1 + $0x4] sm:$0xf]
      %v264 = vld [vmem:[%s1 + $0x8] sm:$0xf]
      %v265 = vld [vmem:[%s1 + $0xc] sm:$0xf]
      %v266 = vld [vmem:[%s1 + $0x10] sm:$0xf]
      %v267 = vld [vmem:[%s1 + $0x14] sm:$0xf]
      %v268 = vld [vmem:[%s1 + $0x18] sm:$0xf]
      %v269 = vld [vmem:[%s1 + $0x1c] sm:$0xf]
      %271 = vset.pattern.permute.xlu0 0
      %272 = vperm.xlu0 %271, %v247
      %v273 = vpop.permute.xlu0 %272
      %276 = vset.pattern.permute.xlu0 0
      %277 = vperm.xlu0 %276, %v248
      %v278 = vpop.permute.xlu0 %277
      %281 = vset.pattern.permute.xlu0 0
      %282 = vperm.xlu0 %281, %v249
      %v283 = vpop.permute.xlu0 %282
      %286 = vset.pattern.permute.xlu0 0
      %287 = vperm.xlu0 %286, %v250
      %v288 = vpop.permute.xlu0 %287
      %291 = vset.pattern.permute.xlu0 0
      %292 = vperm.xlu0 %291, %v251
      %v293 = vpop.permute.xlu0 %292
      %296 = vset.pattern.permute.xlu0 0
      %297 = vperm.xlu0 %296, %v252
      %v298 = vpop.permute.xlu0 %297
      %301 = vset.pattern.permute.xlu0 0
      %302 = vperm.xlu0 %301, %v253
      %v303 = vpop.permute.xlu0 %302
      %306 = vset.pattern.permute.xlu0 0
      %307 = vperm.xlu0 %306, %v254
      %v308 = vpop.permute.xlu0 %307
      %v318 = vunpack.c.l.b16 %v262
      %v319 = vunpack.c.l.b16 %v263
      %v320 = vunpack.c.l.b16 %v264
      %v321 = vunpack.c.l.b16 %v265
      %v322 = vunpack.c.l.b16 %v266
      %v323 = vunpack.c.l.b16 %v267
      %v324 = vunpack.c.l.b16 %v268
      %v325 = vunpack.c.l.b16 %v269
      %v326 = vpack.c.b16 %v319, %v318
      %v327 = vpack.c.b16 %v321, %v320
      %v328 = vpack.c.b16 %v323, %v322
      %v329 = vpack.c.b16 %v325, %v324
      %vm330 = vcmask 64512
      %v332 = vsel %vm330, %v326, 0
      %v335 = vsel %vm330, %v327, 0
      %v338 = vsel %vm330, %v328, 0
      %v341 = vsel %vm330, %v329, 0
      %vm343 = vcmask 1043456
      %v345 = vsel %vm343, %v246, 0
      %347 = vmatprep.subr.bf16.mxu0 0
      %348 = vmatpush1.bf16.msra.mxu0 %v345
      %349 = vmatprep.subr.bf16.mxu0 0
      %350 = vmatpush1.bf16.msra.mxu0 0
      %351 = vmatprep.subr.bf16.mxu0 0
      %352 = vmatpush1.bf16.msra.mxu0 0
      %353 = vmatprep.subr.bf16.mxu0 0
      %354 = vmatpush1.bf16.msra.mxu0 0
      %355 = vmatprep.subr.bf16.mxu0 0
      %356 = vmatpush1.bf16.msra.mxu0 0
      %357 = vmatprep.subr.bf16.mxu0 0
      %358 = vmatpush1.bf16.msra.mxu0 0
      %359 = vmatprep.subr.bf16.mxu0 0
      %360 = vmatpush1.bf16.msra.mxu0 0
      %361 = vmatprep.subr.bf16.mxu0 0
      %362 = vmatpush1.bf16.msra.mxu0 0
      %363 = vmatprep.subr.bf16.mxu0 0
      %364 = vmatpush1.bf16.msra.mxu0 0
      %365 = vmatprep.subr.bf16.mxu0 0
      %366 = vmatpush1.bf16.msra.mxu0 0
      %367 = vmatprep.subr.bf16.mxu0 0
      %368 = vmatpush1.bf16.msra.mxu0 0
      %369 = vmatprep.subr.bf16.mxu0 0
      %370 = vmatpush1.bf16.msra.mxu0 0
      %371 = vmatprep.subr.bf16.mxu0 0
      %372 = vmatpush1.bf16.msra.mxu0 0
      %373 = vmatprep.subr.bf16.mxu0 0
      %374 = vmatpush1.bf16.msra.mxu0 0
      %375 = vmatprep.subr.bf16.mxu0 0
      %376 = vmatpush1.bf16.msra.mxu0 0
      %377 = vmatprep.subr.bf16.mxu0 0
      %378 = vmatpush1.bf16.msra.mxu0 0
      %379 = vmatprep.mubr.bf16.mxu0 0
      %380 = vmatmul.mubr.bf16.gmra.mrb[0].mxu0 %v332
      %v381 = vpop.f32.mrb[0].mxu0
      %v382 = vadd.f32 %v273, %v381
      %v383 = vpop.f32.mrb[0].mxu0
      %v384 = vpop.f32.mrb[0].mxu0
      %v385 = vadd.f32 %v278, %v384
      %v386 = vpop.f32.mrb[0].mxu0
      %387 = vmatprep.mubr.bf16.mxu0 0
      %388 = vmatmul.mubr.bf16.gmra.mrb[0].mxu0 %v335
      %v389 = vpop.f32.mrb[0].mxu0
      %v390 = vadd.f32 %v283, %v389
      %v391 = vpop.f32.mrb[0].mxu0
      %v392 = vpop.f32.mrb[0].mxu0
      %v393 = vadd.f32 %v288, %v392
      %v394 = vpop.f32.mrb[0].mxu0
      %395 = vmatprep.mubr.bf16.mxu0 0
      %396 = vmatmul.mubr.bf16.gmra.mrb[0].mxu0 %v338
      %v397 = vpop.f32.mrb[0].mxu0
      %v398 = vadd.f32 %v293, %v397
      %v399 = vpop.f32.mrb[0].mxu0
      %v400 = vpop.f32.mrb[0].mxu0
      %v401 = vadd.f32 %v298, %v400
      %v402 = vpop.f32.mrb[0].mxu0
      %403 = vmatprep.mubr.bf16.mxu0 0
      %404 = vmatmul.mubr.bf16.gmra.mrb[0].mxu0 %v341
      %v405 = vpop.f32.mrb[0].mxu0
      %v406 = vadd.f32 %v303, %v405
      %v407 = vpop.f32.mrb[0].mxu0
      %v408 = vpop.f32.mrb[0].mxu0
      %v409 = vadd.f32 %v308, %v408
      %v410 = vpop.f32.mrb[0].mxu0
      %411 = vdwg.mxu0
      %v412 = vmax.f32 %v382, 0.0
      %v413 = vmax.f32 %v385, 0.0
      %v414 = vmax.f32 %v390, 0.0
      %v415 = vmax.f32 %v393, 0.0
      %v416 = vmax.f32 %v398, 0.0
      %v417 = vmax.f32 %v401, 0.0
      %v418 = vmax.f32 %v406, 0.0
      %v419 = vmax.f32 %v409, 0.0
      %v420 = vld [vmem:[%s2] sm:$0xf]
      %v421 = vld [vmem:[%s2 + $0x4] sm:$0xf]
      %v422 = vld [vmem:[%s2 + $0x8] sm:$0xf]
      %v423 = vld [vmem:[%s2 + $0xc] sm:$0xf]
      %v424 = vpack.c.bf16 %v413, %v412
      %v425 = vpack.c.bf16 %v415, %v414
      %v426 = vpack.c.bf16 %v417, %v416
      %v427 = vpack.c.bf16 %v419, %v418
      %429 = vset.pattern.permute.xlu0 0
      %430 = vperm.xlu0 %429, %v255
      %v431 = vpop.permute.xlu0 %430
      %434 = vset.pattern.permute.xlu0 0
      %435 = vperm.xlu0 %434, %v256
      %v436 = vpop.permute.xlu0 %435
      %439 = vset.pattern.permute.xlu0 0
      %440 = vperm.xlu0 %439, %v257
      %v441 = vpop.permute.xlu0 %440
      %444 = vset.pattern.permute.xlu0 0
      %445 = vperm.xlu0 %444, %v258
      %v446 = vpop.permute.xlu0 %445
      %v452 = vunpack.c.l.b16 %v420
      %v453 = vunpack.c.l.b16 %v421
      %v454 = vunpack.c.l.b16 %v422
      %v455 = vunpack.c.l.b16 %v423
      %v456 = vpack.c.b16 %v453, %v452
      %v457 = vpack.c.b16 %v455, %v454
      %vm458 = vcmask 523264
      %v460 = vsel %vm458, %v456, 0
      %v463 = vsel %vm458, %v457, 0
      %465 = vmatprep.subr.bf16.mxu0 0
      %466 = vmatpush1.bf16.msra.mxu0 %v424
      %467 = vmatprep.subr.bf16.mxu0 0
      %468 = vmatpush1.bf16.msra.mxu0 %v425
      %469 = vmatprep.subr.bf16.mxu0 0
      %470 = vmatpush1.bf16.msra.mxu0 %v426
      %471 = vmatprep.subr.bf16.mxu0 0
      %472 = vmatpush1.bf16.msra.mxu0 %v427
      %473 = vmatprep.subr.bf16.mxu0 0
      %474 = vmatpush1.bf16.msra.mxu0 0
      %475 = vmatprep.subr.bf16.mxu0 0
      %476 = vmatpush1.bf16.msra.mxu0 0
      %477 = vmatprep.subr.bf16.mxu0 0
      %478 = vmatpush1.bf16.msra.mxu0 0
      %479 = vmatprep.subr.bf16.mxu0 0
      %480 = vmatpush1.bf16.msra.mxu0 0
      %481 = vmatprep.subr.bf16.mxu0 0
      %482 = vmatpush1.bf16.msra.mxu0 0
      %483 = vmatprep.subr.bf16.mxu0 0
      %484 = vmatpush1.bf16.msra.mxu0 0
      %485 = vmatprep.subr.bf16.mxu0 0
      %486 = vmatpush1.bf16.msra.mxu0 0
      %487 = vmatprep.subr.bf16.mxu0 0
      %488 = vmatpush1.bf16.msra.mxu0 0
      %489 = vmatprep.subr.bf16.mxu0 0
      %490 = vmatpush1.bf16.msra.mxu0 0
      %491 = vmatprep.subr.bf16.mxu0 0
      %492 = vmatpush1.bf16.msra.mxu0 0
      %493 = vmatprep.subr.bf16.mxu0 0
      %494 = vmatpush1.bf16.msra.mxu0 0
      %495 = vmatprep.subr.bf16.mxu0 0
      %496 = vmatpush1.bf16.msra.mxu0 0
      %497 = vmatprep.mubr.bf16.mxu0 0
      %498 = vmatmul.mubr.bf16.gmra.mrb[0].mxu0 %v460
      %v499 = vpop.f32.mrb[0].mxu0
      %v500 = vadd.f32 %v431, %v499
      %v501 = vpop.f32.mrb[0].mxu0
      %v502 = vpop.f32.mrb[0].mxu0
      %v503 = vadd.f32 %v436, %v502
      %v504 = vpop.f32.mrb[0].mxu0
      %505 = vmatprep.mubr.bf16.mxu0 0
      %506 = vmatmul.mubr.bf16.gmra.mrb[0].mxu0 %v463
      %v507 = vpop.f32.mrb[0].mxu0
      %v508 = vadd.f32 %v441, %v507
      %v509 = vpop.f32.mrb[0].mxu0
      %v510 = vpop.f32.mrb[0].mxu0
      %v511 = vadd.f32 %v446, %v510
      %v512 = vpop.f32.mrb[0].mxu0
      %513 = vdwg.mxu0
      %v514 = vmax.f32 %v500, 0.0
      %v515 = vmax.f32 %v503, 0.0
      %v516 = vmax.f32 %v508, 0.0
      %v517 = vmax.f32 %v511, 0.0
      %v518 = vld [vmem:[%s3] sm:$0xf]
      %v519 = vld [vmem:[%s3 + $0x4] sm:$0xf]
      %v520 = vpack.c.bf16 %v515, %v514
      %v521 = vpack.c.bf16 %v517, %v516
      %523 = vset.pattern.permute.xlu0 0
      %524 = vperm.xlu0 %523, %v259
      %v525 = vpop.permute.xlu0 %524
      %528 = vset.pattern.permute.xlu0 0
      %529 = vperm.xlu0 %528, %v260
      %v530 = vpop.permute.xlu0 %529
      %v534 = vunpack.c.l.b16 %v518
      %v535 = vunpack.c.l.b16 %v519
      %v536 = vpack.c.b16 %v535, %v534
      %vm537 = vcmask 261120
      %v539 = vsel %vm537, %v536, 0
      %541 = vmatprep.subr.bf16.mxu0 0
      %542 = vmatpush1.bf16.msra.mxu0 %v520
      %543 = vmatprep.subr.bf16.mxu0 0
      %544 = vmatpush1.bf16.msra.mxu0 %v521
      %545 = vmatprep.subr.bf16.mxu0 0
      %546 = vmatpush1.bf16.msra.mxu0 0
      %547 = vmatprep.subr.bf16.mxu0 0
      %548 = vmatpush1.bf16.msra.mxu0 0
      %549 = vmatprep.subr.bf16.mxu0 0
      %550 = vmatpush1.bf16.msra.mxu0 0
      %551 = vmatprep.subr.bf16.mxu0 0
      %552 = vmatpush1.bf16.msra.mxu0 0
      %553 = vmatprep.subr.bf16.mxu0 0
      %554 = vmatpush1.bf16.msra.mxu0 0
      %555 = vmatprep.subr.bf16.mxu0 0
      %556 = vmatpush1.bf16.msra.mxu0 0
      %557 = vmatprep.subr.bf16.mxu0 0
      %558 = vmatpush1.bf16.msra.mxu0 0
      %559 = vmatprep.subr.bf16.mxu0 0
      %560 = vmatpush1.bf16.msra.mxu0 0
      %561 = vmatprep.subr.bf16.mxu0 0
      %562 = vmatpush1.bf16.msra.mxu0 0
      %563 = vmatprep.subr.bf16.mxu0 0
      %564 = vmatpush1.bf16.msra.mxu0 0
      %565 = vmatprep.subr.bf16.mxu0 0
      %566 = vmatpush1.bf16.msra.mxu0 0
      %567 = vmatprep.subr.bf16.mxu0 0
      %568 = vmatpush1.bf16.msra.mxu0 0
      %569 = vmatprep.subr.bf16.mxu0 0
      %570 = vmatpush1.bf16.msra.mxu0 0
      %571 = vmatprep.subr.bf16.mxu0 0
      %572 = vmatpush1.bf16.msra.mxu0 0
      %573 = vmatprep.mubr.bf16.mxu0 0
      %574 = vmatmul.mubr.bf16.gmra.mrb[0].mxu0 %v539
      %v575 = vpop.f32.mrb[0].mxu0
      %v576 = vadd.f32 %v525, %v575
      %v577 = vpop.f32.mrb[0].mxu0
      %v578 = vpop.f32.mrb[0].mxu0
      %v579 = vadd.f32 %v530, %v578
      %v580 = vpop.f32.mrb[0].mxu0
      %581 = vdwg.mxu0
      %v582 = vmax.f32 %v576, 0.0
      %v583 = vmax.f32 %v579, 0.0
      %v584 = vld [vmem:[%s4] sm:$0x1]
      %v585 = vpack.c.bf16 %v583, %v582
      %587 = vset.pattern.permute.xlu0 0
      %588 = vperm.xlu0 %587, %v261
      %v589 = vpop.permute.xlu0 %588
      %vm591 = vcmask 130048
      %v593 = vsel %vm591, %v584, 0
      %595 = vmatprep.subr.bf16.mxu0 0
      %596 = vmatpush1.bf16.msra.mxu0 %v585
      %597 = vmatprep.subr.bf16.mxu0 0
      %598 = vmatpush1.bf16.msra.mxu0 0
      %599 = vmatprep.subr.bf16.mxu0 0
      %600 = vmatpush1.bf16.msra.mxu0 0
      %601 = vmatprep.subr.bf16.mxu0 0
      %602 = vmatpush1.bf16.msra.mxu0 0
      %603 = vmatprep.subr.bf16.mxu0 0
      %604 = vmatpush1.bf16.msra.mxu0 0
      %605 = vmatprep.subr.bf16.mxu0 0
      %606 = vmatpush1.bf16.msra.mxu0 0
      %607 = vmatprep.subr.bf16.mxu0 0
      %608 = vmatpush1.bf16.msra.mxu0 0
      %609 = vmatprep.subr.bf16.mxu0 0
      %610 = vmatpush1.bf16.msra.mxu0 0
      %611 = vmatprep.subr.bf16.mxu0 0
      %612 = vmatpush1.bf16.msra.mxu0 0
      %613 = vmatprep.subr.bf16.mxu0 0
      %614 = vmatpush1.bf16.msra.mxu0 0
      %615 = vmatprep.subr.bf16.mxu0 0
      %616 = vmatpush1.bf16.msra.mxu0 0
      %617 = vmatprep.subr.bf16.mxu0 0
      %618 = vmatpush1.bf16.msra.mxu0 0
      %619 = vmatprep.subr.bf16.mxu0 0
      %620 = vmatpush1.bf16.msra.mxu0 0
      %621 = vmatprep.subr.bf16.mxu0 0
      %622 = vmatpush1.bf16.msra.mxu0 0
      %623 = vmatprep.subr.bf16.mxu0 0
      %624 = vmatpush1.bf16.msra.mxu0 0
      %625 = vmatprep.subr.bf16.mxu0 0
      %626 = vmatpush1.bf16.msra.mxu0 0
      %627 = vmatprep.mubr.bf16.mxu0 0
      %628 = vmatmul.mubr.bf16.gmra.mrb[0].mxu0 %v593
      %v629 = vpop.f32.mrb[0].mxu0
      %v630 = vadd.f32 %v589, %v629
      %v631 = vpop.f32.mrb[0].mxu0
      %v632 = vpop.f32.mrb[0].mxu0
      %v633 = vpop.f32.mrb[0].mxu0
      %634 = vdwg.mxu0
      %v635 = vxor.u32 %v630, 2147483648
      %v636 = vmul.f32 %v635, 1.442695
      %v637 = vpow.pop %v636
      %v638 = vadd.f32 %v637, 1.0
      %v639 = vrcp.pop %v638
      %v640 = vmul.f32 1.0, %v639
      %641 = vst [vmem:[%s244] sm:$0x1] %v640
      %p642 = scmp.lt.s32.totalorder %s17, 2
      %s643 = scalar_select %p642, %s17, 2
      %s644 = scalar_lea.vmem %s6, %s643
      // Predicated region
      $region45: #{titanic_forward.1} parent=43 // pred_check
        %p645 = pneg %p166
      $region46: #{titanic_forward.1} parent=43 // pred_check_branch
        %647 = sbr.rel (%p645) target = $region48
      $region47: #{titanic_forward.1} parent=43 // pred_region
        _
      $region48: #{titanic_forward.1} parent=43 // pred_fallthru
        _
    $region44: #{titanic_forward.1} parent=5 // pred_fallthru
      _
    %p648 = scmp.le.s32.totalorder 2, %s12
    // Predicated region
    $region49: #{titanic_forward.1} parent=5 // pred_check
      %p649 = pneg %p648
    $region50: #{titanic_forward.1} parent=5 // pred_check_branch
      %651 = sbr.rel (%p649) target = $region52
    $region51: #{titanic_forward.1} parent=5 // pred_region
      %s652 = ssub.s32 %s12, 2
      // Predicated region
      $region53: #{titanic_forward.1} parent=51 // pred_check
        %p653 = pneg %p172
      $region54: #{titanic_forward.1} parent=51 // pred_check_branch
        %655 = sbr.rel (%p653) target = $region56
      $region55: #{titanic_forward.1} parent=51 // pred_region
        %p656 = scmp.lt.s32.totalorder %s18, 2
        %s657 = scalar_select %p656, %s18, 2
        %s658 = scalar_lea.vmem %s6, %s657
      $region56: #{titanic_forward.1} parent=51 // pred_fallthru
        _
    $region52: #{titanic_forward.1} parent=5 // pred_fallthru
      _
  $region6: #{titanic_forward.1} parent=0 // loop_footer
    %s16 = sadd.s32 1, %s12
  $region7: #{titanic_forward.1} parent=0 // loop_footer_branch
    %11 = sbr.rel target = $region3
  $region8: #{titanic_forward.1} parent=0 // loop_exit
    _

</llo_original>
